<compile_context>
chip_gen: v6e
topology: v6e:2x2x1
jax: 0.10.0
libtpu: 0.0.40
codegen_flags: <defaults>
</compile_context>

<pallas_src>
import jax
import jax.numpy as jnp
from jax.experimental import pallas as pl
from jax.experimental.pallas import tpu as pltpu


def _mlp_attn_kernel(x_ref, w_ref, b_ref, v_ref, o_ref):
    # x_ref: (TB, S, H) block of batch rows (f32 or bf16)
    # w_ref: (H, A)     proj_w.weight.T (same dtype as x block)
    # b_ref: (1, A)     proj_w.bias (f32)
    # v_ref: (1, A)     proj_v.weight row (f32)
    # o_ref: (TB, H)    f32 (original x dtype)
    TB, S, H = x_ref.shape
    A = w_ref.shape[1]

    x = x_ref[...]                                   # (TB, S, H)
    x2 = x.reshape(TB * S, H)                        # big-M MXU operand (S % 8 == 0 keeps this free)

    # proj_w + tanh: one (TB*S, H) @ (H, A) MXU matmul, f32 accumulation.
    h = jnp.tanh(
        jnp.dot(x2, w_ref[...], preferred_element_type=jnp.float32)
        + b_ref[...]                                 # (1, A) broadcasts over rows
    )                                                # (TB*S, A) f32

    # proj_v as lane-wise multiply + cross-lane reduce -> scores laid out (TB, S).
    scores = jnp.sum(h.reshape(TB, S, A) * v_ref[...], axis=-1)   # (TB, S)

    # Softmax over the sequence axis (lanes); normalization deferred.
    m = jnp.max(scores, axis=-1, keepdims=True)      # (TB, 1)
    e = jnp.exp(scores - m)                          # (TB, S)
    denom = jnp.sum(e, axis=-1, keepdims=True)       # (TB, 1)

    # Weighted sum of x over the sequence: VPU multiply + reduce (rides slack
    # slots; avoids TB separate M=1 MXU pushes + serialized MRF pops).
    xf = x.astype(jnp.float32)                       # keep VPU math in f32 (v5e-safe)
    weighted = jnp.sum(xf * e[:, :, None], axis=1)   # (TB, H)

    o_ref[...] = (weighted / denom).astype(o_ref.dtype)


def _vmem_plan():
    """Return (tile_budget_bytes, vmem_limit_bytes) sized per TPU generation."""
    try:
        phys = int(pltpu.get_tpu_info().vmem_capacity_bytes)
    except Exception:
        phys = 64 << 20                       # v7x per-TensorCore size (smallest)
    limit = min((phys * 3) // 4, 96 << 20)    # ~48 MiB on v7x, 96 MiB on v5e/v6e
    limit = max(limit, 32 << 20)
    budget = max(limit - (8 << 20), 8 << 20)  # headroom for compiler scratch
    return budget, limit


def _choose_block_b(B, S, H, A, x_itemsize, tile_budget_bytes):
    """Largest batch tile whose buffers + in-kernel temporaries fit the budget."""
    f32 = 4
    fixed = 2 * (H * A * x_itemsize + 2 * A * f32)   # resident weight/bias/v blocks
    per_row = (
        2 * S * H * x_itemsize     # double-buffered x input block
        + 2 * S * H * f32          # in-kernel f32 copy of x + (x*e) temporary
        + S * A * f32              # tanh activations
        + 2 * H * f32              # double-buffered output block
    )
    tb = int(max(1, (tile_budget_bytes - fixed) // per_row))
    if tb >= B:
        return B
    tb = min(tb, -(-B // 2))       # keep >= 2 grid steps so both v7x TCs get work
    tb = max(8, (tb // 8) * 8)     # sublane-aligned (TB, H) / (TB, S, H) blocks
    return min(tb, B)


def mlp_attention_forward(x, w_proj, b_proj, v_proj, *, block_b=None,
                          matmul_dtype=None):
    """x: (B, S, H); w_proj: (H, A); b_proj: (A,); v_proj: (A,) -> (B, H)."""
    B, S, H = x.shape
    A = w_proj.shape[1]
    out_dtype = x.dtype   # pinned before any cast (bf16 path still emits f32)

    # Optional low-precision cast of the matmul operands only; bias, softmax
    # math and the output stay f32.
    if matmul_dtype is not None:
        x_in = x.astype(matmul_dtype)
        w_in = w_proj.astype(matmul_dtype)
    else:
        x_in, w_in = x, w_proj

    tile_budget, vmem_limit = _vmem_plan()
    if block_b is None:
        block_b = _choose_block_b(B, S, H, A, x_in.dtype.itemsize, tile_budget)
    tb = min(block_b, B)

    b2d = b_proj.reshape(1, A).astype(jnp.float32)
    v2d = v_proj.reshape(1, A).astype(jnp.float32)

    # No jnp.pad: a ragged last block is handled by Pallas edge-block logic
    # (OOB reads give garbage only in independent batch rows; OOB writes are
    # masked), so no extra HBM round trip of x.
    grid = (pl.cdiv(B, tb),)

    return pl.pallas_call(
        _mlp_attn_kernel,
        out_shape=jax.ShapeDtypeStruct((B, H), out_dtype),
        grid_spec=pltpu.PrefetchScalarGridSpec(
            num_scalar_prefetch=0,
            grid=grid,
            in_specs=[
                pl.BlockSpec((tb, S, H), lambda i: (i, 0, 0)),   # x block
                pl.BlockSpec((H, A), lambda i: (0, 0)),          # proj_w weight
                pl.BlockSpec((1, A), lambda i: (0, 0)),          # proj_w bias
                pl.BlockSpec((1, A), lambda i: (0, 0)),          # proj_v weight
            ],
            out_specs=pl.BlockSpec((tb, H), lambda i: (i, 0)),
        ),
        compiler_params=pltpu.CompilerParams(
            dimension_semantics=("parallel",),        # megacore sharding on v7x
            vmem_limit_bytes=int(vmem_limit),
        ),
    )(x_in, w_in, b2d, v2d)


def _reference(x, w_proj, b_proj, v_proj):
    h = jnp.tanh(jnp.einsum("bsh,ha->bsa", x, w_proj) + b_proj)
    scores = jnp.einsum("bsa,a->bs", h, v_proj)[..., None]    # (B, S, 1)
    p = jax.nn.softmax(scores, axis=1)
    return jnp.sum(x * p, axis=1)


if __name__ == "__main__":
    # Small shapes consistent with the module's forward signature.
    B, S, H = 2, 8, 32
    A = H  # attention_dim defaults to hidden_dim

    key = jax.random.PRNGKey(0)
    kx, kw, kb, kv = jax.random.split(key, 4)

    x = jax.random.normal(kx, (B, S, H), dtype=jnp.float32)
    # Parameters in the layout the kernel consumes (nn.Linear(H, A) and
    # nn.Linear(A, 1, bias=False) weights, transposed / flattened).
    w_proj = jax.random.normal(kw, (H, A), dtype=jnp.float32) * 0.1   # proj_w.weight.T
    b_proj = jax.random.normal(kb, (A,), dtype=jnp.float32) * 0.1     # proj_w.bias
    v_proj = jax.random.normal(kv, (A,), dtype=jnp.float32) * 0.1     # proj_v.weight row

    ref = _reference(x, w_proj, b_proj, v_proj)

    # f32 path: exact math (plain divide, f32 everywhere) -> tight tolerance.
    out = jax.block_until_ready(mlp_attention_forward(x, w_proj, b_proj, v_proj))
    assert out.shape == (B, H) and out.dtype == jnp.float32
    assert jnp.allclose(out, ref, atol=1e-5, rtol=1e-5), "f32 kernel mismatch"

    # bf16 matmul-input path (halves x HBM bytes; accumulation/output stay f32).
    out_bf16 = jax.block_until_ready(
        mlp_attention_forward(x, w_proj, b_proj, v_proj, matmul_dtype=jnp.bfloat16)
    )
    assert out_bf16.dtype == jnp.float32
    assert jnp.allclose(out_bf16, ref, atol=3e-2, rtol=3e-2), "bf16 kernel mismatch"

    # Ragged batch (B % TB != 0) exercising the no-pad edge-block path.
    B2 = 10
    x2 = jax.random.normal(jax.random.PRNGKey(1), (B2, S, H), dtype=jnp.float32)
    ref2 = _reference(x2, w_proj, b_proj, v_proj)
    out2 = jax.block_until_ready(
        mlp_attention_forward(x2, w_proj, b_proj, v_proj, block_b=8)
    )
    assert out2.shape == (B2, H)
    assert jnp.allclose(out2, ref2, atol=1e-5, rtol=1e-5), "ragged-batch mismatch"

    print("KERNEL_OK")
</pallas_src>

<mosaic_0001>
module attributes {stable_mosaic.version = 11 : i64} {
  func.func @_mlp_attn_kernel(%arg0: i32, %arg1: memref<2x8x32xf32, #tpu.memory_space<vmem>>, %arg2: memref<32x32xf32, #tpu.memory_space<vmem>>, %arg3: memref<1x32xf32, #tpu.memory_space<vmem>>, %arg4: memref<1x32xf32, #tpu.memory_space<vmem>>, %arg5: memref<2x32xf32, #tpu.memory_space<vmem>>) attributes {dimension_semantics = [#tpu.dimension_semantics<parallel>], iteration_bounds = array<i64: 1>, scalar_prefetch = 0 : i64, scratch_operands = 0 : i64, tpu.core_type = #tpu.core_type<tc>, window_params = [{transform_indices = @transform_0, window_bounds = array<i64: 2, 8, 32>}, {pipeline_mode = #tpu.pipeline_mode<synchronous>, transform_indices = @transform_1, window_bounds = array<i64: 32, 32>}, {pipeline_mode = #tpu.pipeline_mode<synchronous>, transform_indices = @transform_2, window_bounds = array<i64: 1, 32>}, {pipeline_mode = #tpu.pipeline_mode<synchronous>, transform_indices = @transform_3, window_bounds = array<i64: 1, 32>}, {transform_indices = @transform_4, window_bounds = array<i64: 2, 32>}]} {
    %c0 = arith.constant 0 : index
    %c0_0 = arith.constant 0 : index
    %c0_1 = arith.constant 0 : index
    %0 = vector.load %arg1[%c0, %c0_0, %c0_1] : memref<2x8x32xf32, #tpu.memory_space<vmem>>, vector<2x8x32xf32>
    %1 = vector.shape_cast %0 : vector<2x8x32xf32> to vector<16x32xf32>
    %c0_2 = arith.constant 0 : index
    %c0_3 = arith.constant 0 : index
    %2 = vector.load %arg2[%c0_2, %c0_3] : memref<32x32xf32, #tpu.memory_space<vmem>>, vector<32x32xf32>
    %cst = arith.constant dense<0.000000e+00> : vector<16x32xf32>
    %3 = tpu.matmul %1, %2, %cst {dimension_numbers = #tpu.dot_dimension_numbers<[1], [0], [0], [1], [0, 0, 1, 1], [], []>} : vector<16x32xf32>, vector<32x32xf32>, vector<16x32xf32> -> vector<16x32xf32>
    %c0_4 = arith.constant 0 : index
    %c0_5 = arith.constant 0 : index
    %4 = vector.load %arg3[%c0_4, %c0_5] : memref<1x32xf32, #tpu.memory_space<vmem>>, vector<1x32xf32>
    %5 = vector.broadcast %4 : vector<1x32xf32> to vector<16x32xf32>
    %6 = arith.addf %3, %5 : vector<16x32xf32>
    %7 = math.tanh %6 : vector<16x32xf32>
    %8 = vector.shape_cast %7 : vector<16x32xf32> to vector<2x8x32xf32>
    %c0_6 = arith.constant 0 : index
    %c0_7 = arith.constant 0 : index
    %9 = vector.load %arg4[%c0_6, %c0_7] : memref<1x32xf32, #tpu.memory_space<vmem>>, vector<1x32xf32>
    %10 = vector.shape_cast %9 : vector<1x32xf32> to vector<1x1x32xf32>
    %11 = vector.broadcast %10 : vector<1x1x32xf32> to vector<2x8x32xf32>
    %12 = arith.mulf %8, %11 : vector<2x8x32xf32>
    %cst_8 = arith.constant dense<0.000000e+00> : vector<2x8xf32>
    %13 = vector.multi_reduction <add>, %12, %cst_8 [2] : vector<2x8x32xf32> to vector<2x8xf32>
    %cst_9 = arith.constant dense<0xFF800000> : vector<2xf32>
    %14 = vector.multi_reduction <maximumf>, %13, %cst_9 [1] : vector<2x8xf32> to vector<2xf32>
    %15 = vector.shape_cast %14 : vector<2xf32> to vector<2x1xf32>
    %16 = vector.broadcast %15 : vector<2x1xf32> to vector<2x8xf32>
    %17 = arith.subf %13, %16 : vector<2x8xf32>
    %18 = math.exp %17 : vector<2x8xf32>
    %cst_10 = arith.constant dense<0.000000e+00> : vector<2xf32>
    %19 = vector.multi_reduction <add>, %18, %cst_10 [1] : vector<2x8xf32> to vector<2xf32>
    %20 = vector.shape_cast %19 : vector<2xf32> to vector<2x1xf32>
    %21 = vector.shape_cast %18 : vector<2x8xf32> to vector<2x8x1xf32>
    %22 = vector.broadcast %21 : vector<2x8x1xf32> to vector<2x8x32xf32>
    %23 = arith.mulf %0, %22 : vector<2x8x32xf32>
    %cst_11 = arith.constant dense<0.000000e+00> : vector<2x32xf32>
    %24 = vector.multi_reduction <add>, %23, %cst_11 [1] : vector<2x8x32xf32> to vector<2x32xf32>
    %25 = vector.broadcast %20 : vector<2x1xf32> to vector<2x32xf32>
    %26 = arith.divf %24, %25 : vector<2x32xf32>
    %c0_12 = arith.constant 0 : index
    %c0_13 = arith.constant 0 : index
    %27 = vector.load %arg5[%c0_12, %c0_13] : memref<2x32xf32, #tpu.memory_space<vmem>>, vector<2x32xf32>
    tpu.vector_store %arg5[%c0_12, %c0_13], %26 {strides = array<i32>} : memref<2x32xf32, #tpu.memory_space<vmem>>, vector<2x32xf32>,
    return
  }
  func.func @transform_0(%arg0: i32) -> (i32, i32, i32) {
    %c0_i32 = arith.constant 0 : i32
    %c0_i32_0 = arith.constant 0 : i32
    %c0_i32_1 = arith.constant 0 : i32
    return %arg0, %c0_i32, %c0_i32_0 : i32, i32, i32
  }
  func.func @transform_1(%arg0: i32) -> (i32, i32) {
    %c0_i32 = arith.constant 0 : i32
    %c0_i32_0 = arith.constant 0 : i32
    %c0_i32_1 = arith.constant 0 : i32
    return %c0_i32, %c0_i32_0 : i32, i32
  }
  func.func @transform_2(%arg0: i32) -> (i32, i32) {
    %c0_i32 = arith.constant 0 : i32
    %c0_i32_0 = arith.constant 0 : i32
    %c0_i32_1 = arith.constant 0 : i32
    return %c0_i32, %c0_i32_0 : i32, i32
  }
  func.func @transform_3(%arg0: i32) -> (i32, i32) {
    %c0_i32 = arith.constant 0 : i32
    %c0_i32_0 = arith.constant 0 : i32
    %c0_i32_1 = arith.constant 0 : i32
    return %c0_i32, %c0_i32_0 : i32, i32
  }
  func.func @transform_4(%arg0: i32) -> (i32, i32) {
    %c0_i32 = arith.constant 0 : i32
    %c0_i32_0 = arith.constant 0 : i32
    return %arg0, %c0_i32 : i32, i32
  }
}

</mosaic_0001>

<llo_original>
// kernel: tpu_custom_call.1
$region0: #{tpu_custom_call.1}
  #allocation0 [shape = 'u32[]', space=smem, size = 0x4, offset = 0x4, fixed_abs, tag = 'smem constant byte address 0x4 - core index']
  #allocation1 [shape = 'u32[144,128]{1,0:T(1,128)}', space=vmem, size = 0x12000, scoped, tag = 'internal scratch']
  %s0 = inlined_call_operand.hbm [shape: f32[2,8,32], index: 0, kind: input, shape index: {}]
  %s1 = inlined_call_operand.hbm [shape: f32[32,32], index: 1, kind: input, shape index: {}]
  %s2 = inlined_call_operand.vmem [shape: f32[1,32], index: 2, kind: input, shape index: {}]
  %s3 = inlined_call_operand.vmem [shape: f32[1,32], index: 3, kind: input, shape index: {}]
  %s4 = inlined_call_operand.hbm [shape: f32[2,32], index: 4, kind: output, shape index: {}]
  %s5 = sld [smem:[#allocation0]]
  $region34: #{tpu_custom_call.1} parent=0
    _
  %s7 = ssub.s32 1, %s5
  %s8 = scalar_select 0, %s7, %s5
  $region1: #{tpu_custom_call.1} parent=0
    #allocation2 [shape = 'u8[8192]{0}', space=vmem, size = 0x2000, scoped, tag = 'input window, operand 0, single buffered']
    #allocation3 [shape = 's32[1]{0}', space=sflag, size = 0x4, scoped, tag = 'scoped memory for tpu_custom_call.1']
    #allocation4 [shape = 's32[1]{0}', space=sflag, size = 0x4, scoped, tag = 'scoped memory for tpu_custom_call.1']
    #allocation5 [shape = 'u8[16384]{0}', space=vmem, size = 0x4000, scoped, tag = 'input window, operand 1, single buffered']
    #allocation6 [shape = 's32[1]{0}', space=sflag, size = 0x4, scoped, tag = 'scoped memory for tpu_custom_call.1']
    #allocation7 [shape = 'u8[1024]{0}', space=vmem, size = 0x400, scoped, tag = 'output window, operand 0, single buffered']
    %9 = vsyncpa [#allocation3], 0
    %10 = vsyncpa [#allocation6], 0
    %11 = vsyncpa [#allocation4], 0
    // Predicated region
    $region2: #{tpu_custom_call.1} parent=1 // pred_check
      _
    $region3: #{tpu_custom_call.1} parent=1 // pred_check_branch
      %13 = sbr.rel (0) target = $region5
    $region4: #{tpu_custom_call.1} parent=1 // pred_region
      %s15 = ssub.s32 256, 256
      %16 = vsyncadd [#allocation3], %s15
      %s17 = sshll.u32 [#allocation2], 4
      %s18 = int_to_ptr.vmem [resolvable:$true] %s17
      %23 = dma.hbm_to_vmem [thread:$0]  %s0, 256, %s18, [#allocation3], 128, 128, 8
    $region5: #{tpu_custom_call.1} parent=1 // pred_fallthru
      _
    // Predicated region
    $region6: #{tpu_custom_call.1} parent=1 // pred_check
      _
    $region7: #{tpu_custom_call.1} parent=1 // pred_check_branch
      %25 = sbr.rel (0) target = $region9
    $region8: #{tpu_custom_call.1} parent=1 // pred_region
      %s27 = ssub.s32 512, 512
      %28 = vsyncadd [#allocation6], %s27
      %s29 = sshll.u32 [#allocation5], 4
      %s30 = int_to_ptr.vmem [resolvable:$true] %s29
      %35 = dma.hbm_to_vmem [thread:$0]  %s1, 512, %s30, [#allocation6], 128, 128, 8
    $region9: #{tpu_custom_call.1} parent=1 // pred_fallthru
      _
    // Predicated region
    $region10: #{tpu_custom_call.1} parent=1 // pred_check
      _
    $region11: #{tpu_custom_call.1} parent=1 // pred_check_branch
      %37 = sbr.rel (0) target = $region13
    $region12: #{tpu_custom_call.1} parent=1 // pred_region
      _
    $region13: #{tpu_custom_call.1} parent=1 // pred_fallthru
      _
    // Predicated region
    $region14: #{tpu_custom_call.1} parent=1 // pred_check
      _
    $region15: #{tpu_custom_call.1} parent=1 // pred_check_branch
      %39 = sbr.rel (0) target = $region17
    $region16: #{tpu_custom_call.1} parent=1 // pred_region
      _
    $region17: #{tpu_custom_call.1} parent=1 // pred_fallthru
      _
    // Predicated region
    $region18: #{tpu_custom_call.1} parent=1 // pred_check
      _
    $region19: #{tpu_custom_call.1} parent=1 // pred_check_branch
      %41 = sbr.rel (0) target = $region21
    $region20: #{tpu_custom_call.1} parent=1 // pred_region
      %42 = dma.done [#allocation3], 256
    $region21: #{tpu_custom_call.1} parent=1 // pred_fallthru
      _
    // Predicated region
    $region22: #{tpu_custom_call.1} parent=1 // pred_check
      _
    $region23: #{tpu_custom_call.1} parent=1 // pred_check_branch
      %44 = sbr.rel (0) target = $region25
    $region24: #{tpu_custom_call.1} parent=1 // pred_region
      %45 = dma.done [#allocation6], 512
    $region25: #{tpu_custom_call.1} parent=1 // pred_fallthru
      _
    %v46 = vld [vmem:[#allocation2] sm:$0xff]
    %v47 = vld [vmem:[#allocation2 + $0x8] sm:$0xff]
    %v48 = vld [vmem:[#allocation5] sm:$0xff]
    %v49 = vld [vmem:[#allocation5 + $0x8] sm:$0xff]
    %v50 = vld [vmem:[#allocation5 + $0x10] sm:$0xff]
    %v51 = vld [vmem:[#allocation5 + $0x18] sm:$0xff]
    %v52 = vld [vmem:[%s2] sm:$0x1]
    %v54 = vlaneseq
    %v55 = vshrl.u32 %v54, 7
    %v56 = vsub.s32 0, %v55
    %v57 = vrot.slane %v52, %v56
    %vm59 = vcmask 261120
    %v61 = vsel %vm59, %v46, 0
    %v64 = vsel %vm59, %v47, 0
    %66 = vmatprep.subr.mxu0 0.0
    %67 = vmatpush1.msra.mxu0 0.0
    %68 = vmatprep.subr.mxu0 0.0
    %69 = vmatpush1.msra.mxu0 0.0
    %70 = vmatprep.subr.mxu0 0.0
    %71 = vmatpush1.msra.mxu0 0.0
    %72 = vmatprep.subr.mxu0 0.0
    %73 = vmatpush1.msra.mxu0 0.0
    %74 = vmatprep.subr.mxu0 0.0
    %75 = vmatpush1.msra.mxu0 0.0
    %76 = vmatprep.subr.mxu0 0.0
    %77 = vmatpush1.msra.mxu0 0.0
    %78 = vmatprep.subr.mxu0 0.0
    %79 = vmatpush1.msra.mxu0 0.0
    %80 = vmatprep.subr.mxu0 0.0
    %81 = vmatpush1.msra.mxu0 0.0
    %82 = vmatprep.subr.mxu0 0.0
    %83 = vmatpush1.msra.mxu0 0.0
    %84 = vmatprep.subr.mxu0 0.0
    %85 = vmatpush1.msra.mxu0 0.0
    %86 = vmatprep.subr.mxu0 0.0
    %87 = vmatpush1.msra.mxu0 0.0
    %88 = vmatprep.subr.mxu0 0.0
    %89 = vmatpush1.msra.mxu0 0.0
    %90 = vmatprep.subr.mxu0 0.0
    %91 = vmatpush1.msra.mxu0 %v51
    %92 = vmatprep.subr.mxu0 0.0
    %93 = vmatpush1.msra.mxu0 %v50
    %94 = vmatprep.subr.mxu0 0.0
    %95 = vmatpush1.msra.mxu0 %v49
    %96 = vmatprep.subr.mxu0 0.0
    %97 = vmatpush1.msra.mxu0 %v48
    %98 = vmatprep.subr.mxu0 0.0
    %99 = vmatpush2.msra.mxu0 0.0
    %100 = vmatprep.subr.mxu0 0.0
    %101 = vmatpush2.msra.mxu0 0.0
    %102 = vmatprep.subr.mxu0 0.0
    %103 = vmatpush2.msra.mxu0 0.0
    %104 = vmatprep.subr.mxu0 0.0
    %105 = vmatpush2.msra.mxu0 0.0
    %106 = vmatprep.subr.mxu0 0.0
    %107 = vmatpush2.msra.mxu0 0.0
    %108 = vmatprep.subr.mxu0 0.0
    %109 = vmatpush2.msra.mxu0 0.0
    %110 = vmatprep.subr.mxu0 0.0
    %111 = vmatpush2.msra.mxu0 0.0
    %112 = vmatprep.subr.mxu0 0.0
    %113 = vmatpush2.msra.mxu0 0.0
    %114 = vmatprep.subr.mxu0 0.0
    %115 = vmatpush2.msra.mxu0 0.0
    %116 = vmatprep.subr.mxu0 0.0
    %117 = vmatpush2.msra.mxu0 0.0
    %118 = vmatprep.subr.mxu0 0.0
    %119 = vmatpush2.msra.mxu0 0.0
    %120 = vmatprep.subr.mxu0 0.0
    %121 = vmatpush2.msra.mxu0 0.0
    %122 = vmatprep.subr.mxu0 0.0
    %123 = vmatpush2.msra.mxu0 0.0
    %124 = vmatprep.subr.mxu0 0.0
    %125 = vmatpush2.msra.mxu0 0.0
    %126 = vmatprep.subr.mxu0 0.0
    %127 = vmatpush2.msra.mxu0 0.0
    %128 = vmatprep.subr.mxu0 0.0
    %129 = vmatpush2.msra.mxu0 0.0
    %130 = vmatprep.mubr.f32.mxu0 0.0
    %131 = vmatmul.mubr.f32.gmra.mxu0 %v61
    %v132 = vpop.f32.mrf.mxu0
    %v133 = vadd.f32 %v57, %v132
    %v134 = vpop.f32.mrf.mxu0
    %135 = vmatprep.mubr.f32.mxu0 0.0
    %136 = vmatmul.mubr.f32.gmra.mxu0 %v64
    %v137 = vpop.f32.mrf.mxu0
    %v138 = vadd.f32 %v57, %v137
    %v139 = vpop.f32.mrf.mxu0
    %140 = vdwg.mxu0
    %v141 = vtanh.pop %v133
    %v142 = vtanh.pop %v138
    %v143 = vld [vmem:[%s3] sm:$0x1]
    %v145 = vlaneseq
    %v146 = vshrl.u32 %v145, 7
    %v147 = vsub.s32 0, %v146
    %v148 = vrot.slane %v143, %v147
    %v150 = vmul.f32 %v141, %v148
    %v151 = vmul.f32 %v142, %v148
    %v152 = vsel %vm59, %v150, 0.0
    %153 = vadd.xlane.f32.xlu0 %v152
    %v154 = vpop.xlane.xlu0 %153
    %v155 = vsel %vm59, %v151, 0.0
    %156 = vadd.xlane.f32.xlu0 %v155
    %v157 = vpop.xlane.xlu0 %156
    %v160 = vlaneseq
    %v161 = vand.u32 %v160, 127
    %v162 = vlaneseq
    %v163 = vshrl.u32 %v162, 7
    %v164 = vsub.s32 %v161, %v163
    %v165 = vrot.slane %v154, %v164
    %v166 = vlaneseq
    %v167 = vshrl.u32 %v166, 7
    %v168 = vsub.s32 %v161, %v167
    %v169 = vrot.slane %v157, %v168
    %vm170 = vcmask 1041409
    %v171 = vsel %vm170, %v169, %v165
    %vm173 = vcmask 58368
    %v174 = vsel %vm173, %v171, -inf
    %175 = vmax.xlane.f32.xlu0 %v174
    %v176 = vpop.xlane.xlu0 %175
    %v178 = vlaneseq
    %v179 = vshrl.u32 %v178, 7
    %v180 = vsub.s32 0, %v179
    %v181 = vrot.slane %v176, %v180
    %v182 = vlaneseq
    %v183 = vshrl.u32 %v182, 7
    %v184 = vsub.s32 1, %v183
    %v185 = vrot.slane %v176, %v184
    %v188 = vsub.f32 %v154, %v181
    %v189 = vsub.f32 %v157, %v185
    %v190 = vmul.f32 %v188, 1.442695
    %v191 = vpow.pop %v190
    %v192 = vmul.f32 %v189, 1.442695
    %v193 = vpow.pop %v192
    %196 = vset.pattern.permute.xlu0 0
    %197 = vperm.xlu0 %196, %v191
    %v198 = vpop.permute.xlu0 %197
    %199 = vset.pattern.permute.xlu0 0
    %200 = vperm.xlu0 %199, %v193
    %v201 = vpop.permute.xlu0 %200
    %v202 = vlaneseq
    %v203 = vshrl.u32 %v202, 7
    %v204 = vsub.s32 %v161, %v203
    %v205 = vrot.slane %v198, %v204
    %v206 = vlaneseq
    %v207 = vshrl.u32 %v206, 7
    %v208 = vsub.s32 %v161, %v207
    %v209 = vrot.slane %v201, %v208
    %v210 = vsel %vm170, %v209, %v205
    %v212 = vsel %vm173, %v210, 0.0
    %213 = vadd.xlane.f32.xlu0 %v212
    %v214 = vpop.xlane.xlu0 %213
    %v217 = vmul.f32 %v46, %v198
    %v218 = vmul.f32 %v47, %v201
    %v219 = vsel %vm59, %v217, 0.0
    %v220 = vrot.slane %v219, 4
    %v221 = vadd.f32 %v219, %v220
    %v222 = vrot.slane %v221, 2
    %v223 = vadd.f32 %v221, %v222
    %v224 = vrot.slane %v223, 1
    %v225 = vadd.f32 %v223, %v224
    %v226 = vsel %vm59, %v218, 0.0
    %v227 = vrot.slane %v226, 4
    %v228 = vadd.f32 %v226, %v227
    %v229 = vrot.slane %v228, 2
    %v230 = vadd.f32 %v228, %v229
    %v231 = vrot.slane %v230, 1
    %v232 = vadd.f32 %v230, %v231
    %v234 = vrot.slane %v214, 1
    %v237 = vrcp.pop %v214
    %v238 = vmul.f32 %v225, %v237
    %v239 = vrcp.pop %v234
    %v240 = vmul.f32 %v232, %v239
    %v243 = vrot.slane %v240, 7
    %v244 = vsel %vm170, %v243, %v238
    %vm246 = vcmask 254976
    %247 = vst.msk [vmem:[#allocation7] sm:$0x3] %vm246, %v244
    // Predicated region
    $region26: #{tpu_custom_call.1} parent=1 // pred_check
      _
    $region27: #{tpu_custom_call.1} parent=1 // pred_check_branch
      %249 = sbr.rel (0) target = $region29
    $region28: #{tpu_custom_call.1} parent=1 // pred_region
      %s251 = ssub.s32 32, 32
      %252 = vsyncadd [#allocation4], %s251
      %s254 = sshll.u32 [#allocation7], 4
      %s255 = int_to_ptr.vmem [resolvable:$true] %s254
      %257 = dma.vmem_to_hbm [thread:$0]  %s255, 32, %s4, [#allocation4]
    $region29: #{tpu_custom_call.1} parent=1 // pred_fallthru
      _
    // Predicated region
    $region30: #{tpu_custom_call.1} parent=1 // pred_check
      _
    $region31: #{tpu_custom_call.1} parent=1 // pred_check_branch
      %259 = sbr.rel (0) target = $region33
    $region32: #{tpu_custom_call.1} parent=1 // pred_region
      %260 = dma.done [#allocation4], 32
    $region33: #{tpu_custom_call.1} parent=1 // pred_fallthru
      _
    %261 = vsyncpa [#allocation3], 1
    %262 = vsyncpa [#allocation6], 1
    %263 = vsyncpa [#allocation4], 1

</llo_original>
